<compile_context>
chip_gen: v6e
topology: v6e:2x2x1
jax: 0.10.0
libtpu: 0.0.40
codegen_flags: <defaults>
</compile_context>

<pallas_src>
import functools

import numpy as np

import jax
import jax.numpy as jnp
from jax import lax
from jax.experimental import pallas as pl
from jax.experimental.pallas import tpu as pltpu


# ----------------------------------------------------------------- kernels ---

def _embed_gather_vmem_kernel(idx_ref, w_ref, out_ref):
    """Fast path: field table resident in VMEM; gather via dynamic VMEM loads.

    idx_ref : SMEM (B_pad*F,) int32  -- offset-adjusted, clamped indices (prefetch)
    w_ref   : VMEM (V, E)            -- this field's full table (fetched once/field)
    out_ref : VMEM (TB, F, E)        -- output block for (field, batch-chunk)
    """
    bc = pl.program_id(1)                       # grid = (NF, BC); NF is the slow axis
    tb, f_dim, _ = out_ref.shape
    base = bc * (tb * f_dim)

    def body(b, carry):
        for f in range(f_dim):                  # static unroll; F is small
            row = idx_ref[base + b * f_dim + f]
            out_ref[pl.ds(b, 1), f, :] = w_ref[pl.ds(row, 1), :]
        return carry

    lax.fori_loop(0, tb, body, 0)


def _embed_gather_hbm_kernel(window, idx_ref, w_hbm, out_ref, sems):
    """Fallback path: tables stay in HBM; windowed per-row DMA gather.

    window  : python int             -- in-flight window, in units of batch rows
    idx_ref : SMEM (B_pad*F,) int32
    w_hbm   : HBM  (NF, V, E)        -- never streamed wholesale
    out_ref : VMEM (TB, F, E)
    sems    : DMA semaphore ring, shape (window,)
    """
    bc = pl.program_id(0)                       # grid = (BC, NF)
    i = pl.program_id(1)
    tb, f_dim, _ = out_ref.shape
    base = bc * (tb * f_dim)

    def start_row(b, slot):
        for f in range(f_dim):                  # static unroll; F is small
            pltpu.make_async_copy(
                w_hbm.at[i, idx_ref[base + b * f_dim + f]],   # (E,) row in HBM
                out_ref.at[b, f],                             # (E,) row in out block
                sems.at[slot]).start()

    def wait_row(slot):
        # A wait only consumes the semaphore by the copy's byte count, so use a
        # fixed same-shaped dummy descriptor -> no SMEM index re-reads here.
        for _f in range(f_dim):
            pltpu.make_async_copy(
                w_hbm.at[i, 0], out_ref.at[0, 0], sems.at[slot]).wait()

    # Prime the window (static, small).
    for b in range(min(window, tb)):
        start_row(b, b)

    def body(b, carry):
        slot = lax.rem(b, window)
        wait_row(slot)

        @pl.when(b + window < tb)
        def _():
            start_row(b + window, slot)

        return carry

    lax.fori_loop(0, tb, body, 0)


# ----------------------------------------------------------------- wrapper ---

def embedding_lookup(weights, idx_flat, batch, fields_per_row, *,
                     tb=None, force_path=None,
                     vmem_table_budget_bytes=8 * 1024 * 1024,
                     out_budget_bytes=16 * 1024 * 1024):
    """weights: (NF, V, E) f32, idx_flat: (B*F,) int32 -> (B, NF, F, E) f32."""
    nf, vocab, e = weights.shape
    f = int(fields_per_row)
    batch = int(batch)
    itemsize = jnp.dtype(weights.dtype).itemsize
    table_bytes = vocab * e * itemsize

    use_vmem = table_bytes <= vmem_table_budget_bytes
    if force_path == "vmem":
        use_vmem = True
    elif force_path == "hbm":
        use_vmem = False
    resident = table_bytes if use_vmem else 0

    # Batch-chunk size from a VMEM budget (double-buffered out block + table).
    if tb is None:
        per_row = 2 * f * e * itemsize
        avail = max(out_budget_bytes - 2 * resident, per_row)
        tb = max(1, min(batch, avail // per_row))
    tb = int(max(1, min(int(tb), batch)))
    bc = (batch + tb - 1) // tb
    b_pad = bc * tb

    idx = idx_flat.astype(jnp.int32)
    if b_pad != batch:
        idx = jnp.pad(idx, (0, (b_pad - batch) * f))     # padded rows read row 0

    out_block_bytes = tb * f * e * itemsize
    vmem_limit = int(min(2 * out_block_bytes + 2 * resident + (8 << 20), 64 << 20))

    if use_vmem:
        # NF on the slow axis keeps the field table VMEM-resident across B chunks.
        grid_spec = pltpu.PrefetchScalarGridSpec(
            num_scalar_prefetch=1,
            grid=(nf, bc),
            in_specs=[pl.BlockSpec((None, vocab, e), lambda i, c, idx_r: (i, 0, 0))],
            out_specs=pl.BlockSpec((tb, None, f, e), lambda i, c, idx_r: (c, i, 0, 0)),
        )
        kernel = _embed_gather_vmem_kernel
    else:
        # Bounded in-flight DMA window (in batch rows); small semaphore ring.
        window = max(1, min(tb, max(1, 16 // f)))
        grid_spec = pltpu.PrefetchScalarGridSpec(
            num_scalar_prefetch=1,
            grid=(bc, nf),
            in_specs=[pl.BlockSpec(memory_space=pl.ANY)],   # tables stay in HBM
            out_specs=pl.BlockSpec((tb, None, f, e), lambda c, i, idx_r: (c, i, 0, 0)),
            scratch_shapes=[pltpu.SemaphoreType.DMA((window,))],
        )
        kernel = functools.partial(_embed_gather_hbm_kernel, window)

    out = pl.pallas_call(
        kernel,
        out_shape=jax.ShapeDtypeStruct((b_pad, nf, f, e), weights.dtype),
        grid_spec=grid_spec,
        compiler_params=pltpu.CompilerParams(
            dimension_semantics=("parallel", "parallel"),
            vmem_limit_bytes=vmem_limit),
    )(idx, weights)

    if b_pad != batch:
        out = out[:batch]
    return out


# ------------------------------------------------------------------- module --

class EmbedingLayerPallas:
    """JAX/Pallas port of the PyTorch EmbedingLayer."""

    def __init__(self, num_numerical_fields, num_categorical_fields, num_ids,
                 embed_size, key):
        self.num_numerical_fields = num_numerical_fields
        self.num_categorical_fields = num_categorical_fields
        self.embed_size = embed_size
        self.num_fields = len(num_ids)
        self.vocab = int(sum(num_ids)) + 1

        keys = jax.random.split(key, self.num_fields + 2)

        # Embedding weights: xavier_uniform_ like the reference, stacked (NF, V, E).
        bound = float(np.sqrt(6.0 / (self.vocab + embed_size)))
        self.emb_weights = jnp.stack([
            jax.random.uniform(keys[i], (self.vocab, embed_size), jnp.float32,
                               minval=-bound, maxval=bound)
            for i in range(self.num_fields)
        ])                                                        # (NF, V, E)

        # Conv1d(1, 2E, 1) params (torch default init bounds for fan_in=1 are ±1).
        if num_numerical_fields > 0:
            c = embed_size * 2
            self.conv_w = jax.random.uniform(keys[-2], (c,), jnp.float32, -1.0, 1.0)
            self.conv_b = jax.random.uniform(keys[-1], (c,), jnp.float32, -1.0, 1.0)

        # Per-field-position vocabulary offsets, shape (1, F) like the reference.
        self.offsets = jnp.asarray(
            [0] + list(np.cumsum(num_ids)[:-1]), dtype=jnp.int32)[None, :]

        # TODO(synk): torch named-tensor bookkeeping ('B','N','E') has no JAX
        # equivalent; it does not affect numerics and is dropped.

    def __call__(self, X_categorical, X_numerical=None):
        B, F = X_categorical.shape
        E, NF = self.embed_size, self.num_fields

        idx = (X_categorical.astype(jnp.int32) + self.offsets).reshape(-1)   # (B*F,)
        idx = jnp.clip(idx, 0, self.vocab - 1)    # jnp.take-style clamp; guards gather

        gathered = embedding_lookup(self.emb_weights, idx, B, F)   # (B, NF, F, E)
        # torch.cat([emb_i(X) for i], dim=1): field i occupies rows [i*F:(i+1)*F],
        # which is exactly the row-major order of (B, NF, F, E) -> free reshape.
        cat_emb = gathered.reshape(B, NF * F, E)

        if X_numerical is None:
            return cat_emb

        # Conv1d(1, 2E, 1): rank-1 outer product + bias; tiny -> left to XLA.
        conv = self.conv_w[None, :, None] * X_numerical + self.conv_b[None, :, None]
        num_emb = conv.reshape(B, self.num_numerical_fields * 2, E)
        # TODO(synk): eliminating this concat needs an Element-offset out spec
        # (categorical row offset num_num*2 + i*F is not block-aligned).
        return jnp.concatenate([num_emb, cat_emb], axis=1)


# ---------------------------------------------------------------- reference --

def reference_forward(layer, X_categorical, X_numerical=None):
    idx = jnp.clip(X_categorical.astype(jnp.int32) + layer.offsets, 0, layer.vocab - 1)
    cat_emb = jnp.concatenate(
        [jnp.take(layer.emb_weights[i], idx, axis=0) for i in range(layer.num_fields)],
        axis=1)
    if X_numerical is None:
        return cat_emb
    conv = layer.conv_w[None, :, None] * X_numerical + layer.conv_b[None, :, None]
    num_emb = conv.reshape(X_numerical.shape[0],
                           layer.num_numerical_fields * 2, layer.embed_size)
    return jnp.concatenate([num_emb, cat_emb], axis=1)


# --------------------------------------------------------------------- main --

if __name__ == "__main__":
    key = jax.random.PRNGKey(0)
    k_layer, k_cat, k_num, k_cat3 = jax.random.split(key, 4)

    num_numerical_fields = 3
    num_ids = [5, 7, 6]          # -> num_fields = 3, vocab = 19
    num_categorical_fields = len(num_ids)
    embed_size = 8
    B = 2

    layer = EmbedingLayerPallas(num_numerical_fields, num_categorical_fields,
                                num_ids, embed_size, k_layer)

    X_categorical = jax.random.randint(
        k_cat, (B, num_categorical_fields), 0, min(num_ids), dtype=jnp.int32)
    X_numerical = jax.random.normal(
        k_num, (B, 1, num_numerical_fields), dtype=jnp.float32)

    # Full forward (fast VMEM-gather path).
    out = jax.block_until_ready(layer(X_categorical, X_numerical))
    expected_rows = 2 * num_numerical_fields + num_categorical_fields * num_categorical_fields
    assert out.shape == (B, expected_rows, embed_size), out.shape
    ref = jax.block_until_ready(reference_forward(layer, X_categorical, X_numerical))
    np.testing.assert_allclose(np.asarray(out), np.asarray(ref), rtol=1e-5, atol=1e-5)

    # X_numerical=None branch.
    out2 = jax.block_until_ready(layer(X_categorical, None))
    ref2 = jax.block_until_ready(reference_forward(layer, X_categorical, None))
    np.testing.assert_allclose(np.asarray(out2), np.asarray(ref2), rtol=1e-5, atol=1e-5)

    # Exercise both gather paths plus B-chunking / padding (B=3, TB=2 -> pad to 4).
    B3 = 3
    Xc3 = jax.random.randint(
        k_cat3, (B3, num_categorical_fields), 0, min(num_ids), dtype=jnp.int32)
    idx3 = jnp.clip((Xc3.astype(jnp.int32) + layer.offsets).reshape(-1),
                    0, layer.vocab - 1)
    ref_gather3 = jnp.stack(
        [jnp.take(layer.emb_weights[i], idx3.reshape(B3, -1), axis=0)
         for i in range(layer.num_fields)], axis=1)               # (B3, NF, F, E)
    for path, tb in (("vmem", 2), ("hbm", 2), ("hbm", None)):
        got = embedding_lookup(layer.emb_weights, idx3, B3,
                               num_categorical_fields, tb=tb, force_path=path)
        got = jax.block_until_ready(got)
        np.testing.assert_allclose(np.asarray(got), np.asarray(ref_gather3),
                                   rtol=1e-5, atol=1e-5)

    print("KERNEL_OK")
</pallas_src>

<mosaic_0001>
module attributes {stable_mosaic.version = 11 : i64} {
  func.func @_embed_gather_vmem_kernel(%arg0: i32, %arg1: i32, %arg2: memref<6xi32, #tpu.memory_space<smem>>, %arg3: memref<1x19x8xf32, #tpu.memory_space<vmem>>, %arg4: memref<2x1x3x8xf32, #tpu.memory_space<vmem>>) attributes {dimension_semantics = [#tpu.dimension_semantics<parallel>, #tpu.dimension_semantics<parallel>], iteration_bounds = array<i64: 3, 1>, scalar_prefetch = 1 : i64, scratch_operands = 0 : i64, tpu.core_type = #tpu.core_type<tc>, window_params = [{transform_indices = @transform_0, window_bounds = array<i64: 1, 19, 8>}, {transform_indices = @transform_1, window_bounds = array<i64: 2, 1, 3, 8>}]} {
    %c6_i32 = arith.constant 6 : i32
    %0 = arith.muli %arg1, %c6_i32 : i32
    %c0_i32 = arith.constant 0 : i32
    %c2_i32 = arith.constant 2 : i32
    %1 = arith.addi %c0_i32, %c2_i32 : i32
    %c1_i32 = arith.constant 1 : i32
    scf.for %arg5 = %c0_i32 to %1 step %c1_i32  : i32 {
      %c3_i32 = arith.constant 3 : i32
      %2 = arith.muli %arg5, %c3_i32 : i32
      %3 = arith.addi %0, %2 : i32
      %c0_i32_1 = arith.constant 0 : i32
      %4 = arith.addi %3, %c0_i32_1 : i32
      %5 = arith.index_cast %4 : i32 to index
      %6 = memref.load %arg2[%5] : memref<6xi32, #tpu.memory_space<smem>>
      %c0 = arith.constant 0 : index
      %7 = arith.index_cast %6 : i32 to index
      %c0_2 = arith.constant 0 : index
      %8 = vector.load %arg3[%c0, %7, %c0_2] : memref<1x19x8xf32, #tpu.memory_space<vmem>>, vector<1x1x8xf32>
      %9 = vector.shape_cast %8 : vector<1x1x8xf32> to vector<1x8xf32>
      %10 = arith.index_cast %arg5 : i32 to index
      %c0_3 = arith.constant 0 : index
      %c0_4 = arith.constant 0 : index
      %c0_5 = arith.constant 0 : index
      %11 = vector.load %arg4[%10, %c0_3, %c0_4, %c0_5] : memref<2x1x3x8xf32, #tpu.memory_space<vmem>>, vector<1x1x1x8xf32>
      %12 = vector.shape_cast %11 : vector<1x1x1x8xf32> to vector<1x8xf32>
      %13 = vector.shape_cast %9 : vector<1x8xf32> to vector<1x1x1x8xf32>
      tpu.vector_store %arg4[%10, %c0_3, %c0_4, %c0_5], %13 {strides = array<i32>} : memref<2x1x3x8xf32, #tpu.memory_space<vmem>>, vector<1x1x1x8xf32>,
      %c3_i32_6 = arith.constant 3 : i32
      %14 = arith.muli %arg5, %c3_i32_6 : i32
      %15 = arith.addi %0, %14 : i32
      %c1_i32_7 = arith.constant 1 : i32
      %16 = arith.addi %15, %c1_i32_7 : i32
      %17 = arith.index_cast %16 : i32 to index
      %18 = memref.load %arg2[%17] : memref<6xi32, #tpu.memory_space<smem>>
      %c0_8 = arith.constant 0 : index
      %19 = arith.index_cast %18 : i32 to index
      %c0_9 = arith.constant 0 : index
      %20 = vector.load %arg3[%c0_8, %19, %c0_9] : memref<1x19x8xf32, #tpu.memory_space<vmem>>, vector<1x1x8xf32>
      %21 = vector.shape_cast %20 : vector<1x1x8xf32> to vector<1x8xf32>
      %22 = arith.index_cast %arg5 : i32 to index
      %c0_10 = arith.constant 0 : index
      %c1 = arith.constant 1 : index
      %c0_11 = arith.constant 0 : index
      %23 = vector.load %arg4[%22, %c0_10, %c1, %c0_11] : memref<2x1x3x8xf32, #tpu.memory_space<vmem>>, vector<1x1x1x8xf32>
      %24 = vector.shape_cast %23 : vector<1x1x1x8xf32> to vector<1x8xf32>
      %25 = vector.shape_cast %21 : vector<1x8xf32> to vector<1x1x1x8xf32>
      tpu.vector_store %arg4[%22, %c0_10, %c1, %c0_11], %25 {strides = array<i32>} : memref<2x1x3x8xf32, #tpu.memory_space<vmem>>, vector<1x1x1x8xf32>,
      %c3_i32_12 = arith.constant 3 : i32
      %26 = arith.muli %arg5, %c3_i32_12 : i32
      %27 = arith.addi %0, %26 : i32
      %c2_i32_13 = arith.constant 2 : i32
      %28 = arith.addi %27, %c2_i32_13 : i32
      %29 = arith.index_cast %28 : i32 to index
      %30 = memref.load %arg2[%29] : memref<6xi32, #tpu.memory_space<smem>>
      %c0_14 = arith.constant 0 : index
      %31 = arith.index_cast %30 : i32 to index
      %c0_15 = arith.constant 0 : index
      %32 = vector.load %arg3[%c0_14, %31, %c0_15] : memref<1x19x8xf32, #tpu.memory_space<vmem>>, vector<1x1x8xf32>
      %33 = vector.shape_cast %32 : vector<1x1x8xf32> to vector<1x8xf32>
      %34 = arith.index_cast %arg5 : i32 to index
      %c0_16 = arith.constant 0 : index
      %c2 = arith.constant 2 : index
      %c0_17 = arith.constant 0 : index
      %35 = vector.load %arg4[%34, %c0_16, %c2, %c0_17] : memref<2x1x3x8xf32, #tpu.memory_space<vmem>>, vector<1x1x1x8xf32>
      %36 = vector.shape_cast %35 : vector<1x1x1x8xf32> to vector<1x8xf32>
      %37 = vector.shape_cast %33 : vector<1x8xf32> to vector<1x1x1x8xf32>
      tpu.vector_store %arg4[%34, %c0_16, %c2, %c0_17], %37 {strides = array<i32>} : memref<2x1x3x8xf32, #tpu.memory_space<vmem>>, vector<1x1x1x8xf32>,
    }
    %c2_i32_0 = arith.constant 2 : i32
    return
  }
  func.func @transform_0(%arg0: i32, %arg1: i32, %arg2: memref<6xi32, #tpu.memory_space<smem>>) -> (i32, i32, i32) {
    %c0_i32 = arith.constant 0 : i32
    %c0_i32_0 = arith.constant 0 : i32
    %c0_i32_1 = arith.constant 0 : i32
    return %arg0, %c0_i32, %c0_i32_0 : i32, i32, i32
  }
  func.func @transform_1(%arg0: i32, %arg1: i32, %arg2: memref<6xi32, #tpu.memory_space<smem>>) -> (i32, i32, i32, i32) {
    %c0_i32 = arith.constant 0 : i32
    %c0_i32_0 = arith.constant 0 : i32
    %c0_i32_1 = arith.constant 0 : i32
    return %arg1, %arg0, %c0_i32, %c0_i32_0 : i32, i32, i32, i32
  }
}

</mosaic_0001>

<llo_original>
// kernel: tpu_custom_call.1
$region0: #{tpu_custom_call.1}
  #allocation0 [shape = 'u32[]', space=smem, size = 0x4, offset = 0x4, fixed_abs, tag = 'smem constant byte address 0x4 - core index']
  #allocation1 [shape = 'u32[144,128]{1,0:T(1,128)}', space=vmem, size = 0x12000, scoped, tag = 'internal scratch']
  #allocation2 [shape = 's32[1]{0}', space=sflag, size = 0x4, scoped, tag = 'scoped memory for tpu_custom_call.1']
  #allocation3 [shape = 'u8[512]{0}', space=smem, size = 0x200, scoped, tag = 'prefetched SMEM operand 0']
  %s0 = inlined_call_operand.vmem [shape: s32[6], index: 0, kind: input, shape index: {}]
  %s1 = inlined_call_operand.vmem [shape: f32[3,19,8], index: 1, kind: input, shape index: {}]
  %s2 = inlined_call_operand.vmem [shape: f32[2,3,3,8], index: 2, kind: output, shape index: {}]
  %s3 = sld [smem:[#allocation0]]
  $region81: #{tpu_custom_call.1} parent=0
    _
  %s5 = ssub.s32 1, %s3
  %s6 = scalar_select 0, %s5, %s3
  %s7 = sshll.u32 %s0, 4
  %s8 = int_to_ptr.vmem [resolvable:$true] %s7
  %10 = dma.vmem_to_smem %s8, 16, [#allocation3], [#allocation2]
  %11 = dma.done [#allocation2], 16
  %12 = sfence
  $region1: #{tpu_custom_call.1} parent=0
    #allocation4 [shape = 'u8[8192]{0}', space=vmem, size = 0x2000, scoped, tag = 'output window, operand 0']
    loop: start=0, step=1, limit=5
    $region2: #{tpu_custom_call.1} parent=1 // loop_pre_header
      _
    $region3: #{tpu_custom_call.1} parent=1 // loop_header
      %s14 = sphi 0, %s18
      %p15 = scmp.ge.s32.totalorder %s14, 5
      %s21 = sphi 0, %s33
      %s22 = sphi 0, %s29
      %s23 = sphi 0, %s21
      %s24 = sphi 0, %s22
      %s25 = sphi 0, %s23
      %s26 = sphi 0, %s24
      %s36 = sphi 0, %s38
      %s39 = sphi 0, %s36
      %s40 = sphi 0, %s39
      %s56 = sphi 0, %s40
      %s64 = sphi 0, %s66
      %s67 = sphi 0, %s64
      %s68 = sphi 0, %s67
      %s84 = sphi 0, %s68
    $region4: #{tpu_custom_call.1} parent=1 // loop_header_branch
      %17 = sbr.rel (%p15) target = $region8
    $region5: #{tpu_custom_call.1} parent=1 // loop_body
      %s19 = ssub.s32 %s14, 1
      %s20 = ssub.s32 %s14, 2
      %s27 = sadd.s32 1, %s22
      %p28 = scmp.ge.s32.totalorder %s27, 1
      %s29 = scalar_select %p28, 0, %s27
      %s30 = sadd.s32 1, %s21
      %s31 = scalar_select %p28, %s30, %s21
      %p32 = scmp.ge.s32.totalorder %s31, 3
      %s33 = scalar_select %p32, 0, %s31
      %s34 = ssub.s32 %s21, %s33
      %p35 = scmp.eq.s32.totalorder %s34, 0
      %s37 = sadd.s32 %s36, 1
      %s38 = scalar_select %p35, %s36, %s37
      %p41 = pneg %p35
      %p42 = scmp.eq.s32.totalorder %s14, 2
      %p43 = por %p41, %p42
      %p44 = scmp.ne.s32.totalorder %s36, %s39
      %p45 = scmp.eq.s32.totalorder %s14, 0
      %p46 = por %p44, %p45
      %p47 = scmp.ne.s32.totalorder %s36, %s39
      %p48 = scmp.eq.s32.totalorder %s19, 2
      %p49 = por %p47, %p48
      %p50 = scmp.ne.s32.totalorder %s39, %s40
      %p51 = scmp.eq.s32.totalorder %s19, 0
      %p52 = por %p50, %p51
      %p53 = scmp.ne.s32.totalorder %s39, %s40
      %p54 = scmp.eq.s32.totalorder %s20, 2
      %p55 = por %p53, %p54
      %p57 = scmp.ne.s32.totalorder %s40, %s56
      %p58 = scmp.eq.s32.totalorder %s20, 0
      %p59 = por %p57, %p58
      %s60 = ssub.s32 %s22, %s29
      %s61 = ssub.s32 %s21, %s33
      %s62 = sor.u32 %s60, %s61
      %p63 = scmp.eq.s32.totalorder %s62, 0
      %s65 = sadd.s32 %s64, 1
      %s66 = scalar_select %p63, %s64, %s65
      %p69 = pneg %p63
      %p70 = scmp.eq.s32.totalorder %s14, 2
      %p71 = por %p69, %p70
      %p72 = scmp.ne.s32.totalorder %s64, %s67
      %p73 = scmp.eq.s32.totalorder %s14, 0
      %p74 = por %p72, %p73
      %p75 = scmp.ne.s32.totalorder %s64, %s67
      %p76 = scmp.eq.s32.totalorder %s19, 2
      %p77 = por %p75, %p76
      %p78 = scmp.ne.s32.totalorder %s67, %s68
      %p79 = scmp.eq.s32.totalorder %s19, 0
      %p80 = por %p78, %p79
      %p81 = scmp.ne.s32.totalorder %s67, %s68
      %p82 = scmp.eq.s32.totalorder %s20, 2
      %p83 = por %p81, %p82
      %p85 = scmp.ne.s32.totalorder %s68, %s84
      %p86 = scmp.eq.s32.totalorder %s20, 0
      %p87 = por %p85, %p86
      %p88 = scmp.le.s32.totalorder 1, %s14
      %p89 = scmp.lt.s32.totalorder %s14, 4
      %p90 = pnand %p88, %p89
      %p91 = pneg %p90
      // Predicated region
      $region9: #{tpu_custom_call.1} parent=5 // pred_check
        _
      $region10: #{tpu_custom_call.1} parent=5 // pred_check_branch
        %93 = sbr.rel (%p90) target = $region12
      $region11: #{tpu_custom_call.1} parent=5 // pred_region
        %s94 = ssub.s32 %s14, 1
      $region12: #{tpu_custom_call.1} parent=5 // pred_fallthru
        _
      %p95 = scmp.lt.s32.totalorder %s14, 3
      // Predicated region
      $region13: #{tpu_custom_call.1} parent=5 // pred_check
        %p96 = pneg %p95
      $region14: #{tpu_custom_call.1} parent=5 // pred_check_branch
        %98 = sbr.rel (%p96) target = $region16
      $region15: #{tpu_custom_call.1} parent=5 // pred_region
        // Predicated region
        $region17: #{tpu_custom_call.1} parent=15 // pred_check
          %p99 = pneg %p46
        $region18: #{tpu_custom_call.1} parent=15 // pred_check_branch
          %101 = sbr.rel (%p99) target = $region20
        $region19: #{tpu_custom_call.1} parent=15 // pred_region
          %p102 = scmp.lt.s32.totalorder %s21, 2
          %s103 = scalar_select %p102, %s21, 2
          %s104 = smul.addr %s103, 3
          %s105 = smul.addr %s104, 8
          %s106 = scalar_lea.vmem %s1, %s105
        $region20: #{tpu_custom_call.1} parent=15 // pred_fallthru
          _
      $region16: #{tpu_custom_call.1} parent=5 // pred_fallthru
        _
      %p107 = scmp.le.s32.totalorder 1, %s14
      %p108 = scmp.lt.s32.totalorder %s14, 4
      %p109 = pnand %p107, %p108
      %p110 = pneg %p109
      // Predicated region
      $region21: #{tpu_custom_call.1} parent=5 // pred_check
        _
      $region22: #{tpu_custom_call.1} parent=5 // pred_check_branch
        %112 = sbr.rel (%p109) target = $region24
      $region23: #{tpu_custom_call.1} parent=5 // pred_region
        %s113 = ssub.s32 %s14, 1
        %p114 = scmp.lt.s32.totalorder %s23, 2
        %s115 = scalar_select %p114, %s23, 2
        %s116 = smul.addr %s115, 3
        %s117 = smul.addr %s116, 8
        %s118 = scalar_lea.vmem %s1, %s117
        %p119 = pneg %p52
        %p120 = pneg %p49
        %p121 = pneg %p80
        %p122 = pneg %p77
        %s123 = sand.u32 %s67, 1
        %s124 = sand.u32 %s67, 1
        %s125 = smul.addr %s124, 8
        %s126 = scalar_lea.vmem [#allocation4], %s125
        %p127 = scmp.lt.s32.totalorder %s23, 2
        %s128 = scalar_select %p127, %s23, 2
        %s129 = smul.addr %s128, 3
        %s130 = smul.addr %s129, 8
        %s131 = scalar_lea.vmem %s1, %s130
        %s132 = smul.u32 2, %s24
        %s133 = smul.u32 %s24, 6
        loop: start=0, step=1, limit=2
        $region25: #{tpu_custom_call.1} parent=23 // loop_pre_header
          _
        $region26: #{tpu_custom_call.1} parent=23 // loop_header
          %s135 = sphi 0, %s139
          %p136 = scmp.ge.s32.totalorder %s135, 2
        $region27: #{tpu_custom_call.1} parent=23 // loop_header_branch
          %138 = sbr.rel (%p136) target = $region31
        $region28: #{tpu_custom_call.1} parent=23 // loop_body
          %s140 = smul.u32 %s135, 3
          %s141 = sadd.s32 %s133, %s140
          %s142 = sld [smem:[#allocation3 + %s141]]
          %s143 = scalar_lea.vmem %s131, %s142
          %v144 = vld [vmem:[%s143] sm:$0x1]
          %s145 = smul.u32 %s135, 4
          %s146 = scalar_lea.vmem %s126, %s145 [#allocation4]
          %vm147 = vcmask 57344
          %148 = vst.msk [vmem:[%s146] sm:$0x1] %vm147, %v144
          %s149 = sadd.s32 %s141, 1
          %s150 = sld [smem:[#allocation3 + %s149]]
          %s151 = scalar_lea.vmem %s131, %s150
          %v152 = vld [vmem:[%s151] sm:$0x1]
          %153 = vst.msk [vmem:[%s146 + $0x1] sm:$0x1] %vm147, %v152
          %s154 = sadd.s32 %s141, 2
          %s155 = sld [smem:[#allocation3 + %s154]]
          %s156 = scalar_lea.vmem %s131, %s155
          %v157 = vld [vmem:[%s156] sm:$0x1]
          %158 = vst.msk [vmem:[%s146 + $0x2] sm:$0x1] %vm147, %v157
        $region29: #{tpu_custom_call.1} parent=23 // loop_footer
          %s139 = sadd.s32 1, %s135
        $region30: #{tpu_custom_call.1} parent=23 // loop_footer_branch
          %134 = sbr.rel target = $region26
        $region31: #{tpu_custom_call.1} parent=23 // loop_exit
          _
        %s159 = sand.u32 %s67, 1
        %s160 = sand.u32 %s67, 1
        %s161 = smul.addr %s160, 8
        %s162 = scalar_lea.vmem [#allocation4], %s161
        // Predicated region
        $region32: #{tpu_custom_call.1} parent=23 // pred_check
          %p163 = pneg %p77
        $region33: #{tpu_custom_call.1} parent=23 // pred_check_branch
          %165 = sbr.rel (%p163) target = $region35
        $region34: #{tpu_custom_call.1} parent=23 // pred_region
          %s166 = smul.u32 2, %s24
          %s167 = smul.addr %s166, 3
          %s168 = sadd.s32 %s23, %s167
          %s169 = smul.addr %s168, 4
          %s170 = scalar_lea.vmem %s2, %s169
          // Predicated region
          $region36: #{tpu_custom_call.1} parent=34 // pred_check
            _
          $region37: #{tpu_custom_call.1} parent=34 // pred_check_branch
            %172 = sbr.rel (0) target = $region39
          $region38: #{tpu_custom_call.1} parent=34 // pred_region
            // Predicated region
            $region40: #{tpu_custom_call.1} parent=38 // pred_check
              _
            $region41: #{tpu_custom_call.1} parent=38 // pred_check_branch
              %174 = sbr.rel target = $region43
            $region42: #{tpu_custom_call.1} parent=38 // pred_region
              // Predicated region
              $region55: #{tpu_custom_call.1} parent=42 // pred_check
                _
              $region56: #{tpu_custom_call.1} parent=42 // pred_check_branch
                %192 = sbr.rel (0) target = $region58
              $region57: #{tpu_custom_call.1} parent=42 // pred_region
                loop: start=0, step=1, limit=1
                $region59: #{tpu_custom_call.1} parent=57 // loop_pre_header
                  _
                $region60: #{tpu_custom_call.1} parent=57 // loop_header
                  %s194 = sphi 0, %s198
                  %p195 = scmp.ge.s32.totalorder %s194, 1
                  %s199 = sphi %s162, %s162
                  %s200 = sphi %s170, %s170
                $region61: #{tpu_custom_call.1} parent=57 // loop_header_branch
                  %197 = sbr.rel (%p195) target = $region65
                $region62: #{tpu_custom_call.1} parent=57 // loop_body
                  _
                $region63: #{tpu_custom_call.1} parent=57 // loop_footer
                  %s198 = sadd.s32 1, %s194
                $region64: #{tpu_custom_call.1} parent=57 // loop_footer_branch
                  %193 = sbr.rel target = $region60
                $region65: #{tpu_custom_call.1} parent=57 // loop_exit
                  _
                %s202 = ssub.s32 16, 1
                loop: start=0, step=1, limit=1
                $region66: #{tpu_custom_call.1} parent=57 // loop_pre_header
                  _
                $region67: #{tpu_custom_call.1} parent=57 // loop_header
                  %s204 = sphi 0, %s208
                  %p205 = scmp.ge.s32.totalorder %s204, 1
                  %s209 = sphi %s162, %s162
                  %s210 = sphi %s170, %s170
                $region68: #{tpu_custom_call.1} parent=57 // loop_header_branch
                  %207 = sbr.rel (%p205) target = $region72
                $region69: #{tpu_custom_call.1} parent=57 // loop_body
                  %v211 = vld [vmem:[%s209] sm:%s202]
                  %212 = vst [vmem:[%s210] sm:%s202] %v211
                  %v213 = vld [vmem:[%s209 + $0x4] sm:%s202]
                  %214 = vst [vmem:[%s210 + $0xc] sm:%s202] %v213
                $region70: #{tpu_custom_call.1} parent=57 // loop_footer
                  %s208 = sadd.s32 1, %s204
                $region71: #{tpu_custom_call.1} parent=57 // loop_footer_branch
                  %203 = sbr.rel target = $region67
                $region72: #{tpu_custom_call.1} parent=57 // loop_exit
                  _
              $region58: #{tpu_custom_call.1} parent=42 // pred_fallthru
                _
            $region43: #{tpu_custom_call.1} parent=38 // pred_fallthru
              _
            // Predicated region
            $region44: #{tpu_custom_call.1} parent=38 // pred_check
              _
            $region45: #{tpu_custom_call.1} parent=38 // pred_check_branch
              %176 = sbr.rel (0) target = $region47
            $region46: #{tpu_custom_call.1} parent=38 // pred_region
              %s178 = ssub.s32 16, 1
              loop: start=0, step=1, limit=1
              $region48: #{tpu_custom_call.1} parent=46 // loop_pre_header
                _
              $region49: #{tpu_custom_call.1} parent=46 // loop_header
                %s180 = sphi 0, %s184
                %p181 = scmp.ge.s32.totalorder %s180, 1
                %s185 = sphi %s162, %s162
                %s186 = sphi %s170, %s170
              $region50: #{tpu_custom_call.1} parent=46 // loop_header_branch
                %183 = sbr.rel (%p181) target = $region54
              $region51: #{tpu_custom_call.1} parent=46 // loop_body
                %v187 = vld [vmem:[%s185] sm:%s178]
                %188 = vst [vmem:[%s186] sm:%s178] %v187
                %v189 = vld [vmem:[%s185 + $0x4] sm:%s178]
                %190 = vst [vmem:[%s186 + $0xc] sm:%s178] %v189
              $region52: #{tpu_custom_call.1} parent=46 // loop_footer
                %s184 = sadd.s32 1, %s180
              $region53: #{tpu_custom_call.1} parent=46 // loop_footer_branch
                %179 = sbr.rel target = $region49
              $region54: #{tpu_custom_call.1} parent=46 // loop_exit
                _
            $region47: #{tpu_custom_call.1} parent=38 // pred_fallthru
              _
          $region39: #{tpu_custom_call.1} parent=34 // pred_fallthru
            _
          %215 = vnop
        $region35: #{tpu_custom_call.1} parent=23 // pred_fallthru
          _
      $region24: #{tpu_custom_call.1} parent=5 // pred_fallthru
        _
      %p216 = scmp.le.s32.totalorder 2, %s14
      // Predicated region
      $region73: #{tpu_custom_call.1} parent=5 // pred_check
        %p217 = pneg %p216
      $region74: #{tpu_custom_call.1} parent=5 // pred_check_branch
        %219 = sbr.rel (%p217) target = $region76
      $region75: #{tpu_custom_call.1} parent=5 // pred_region
        %s220 = ssub.s32 %s14, 2
        // Predicated region
        $region77: #{tpu_custom_call.1} parent=75 // pred_check
          %p221 = pneg %p83
        $region78: #{tpu_custom_call.1} parent=75 // pred_check_branch
          %223 = sbr.rel (%p221) target = $region80
        $region79: #{tpu_custom_call.1} parent=75 // pred_region
          %s224 = sand.u32 %s68, 1
          %s225 = sand.u32 %s68, 1
          %s226 = smul.addr %s225, 8
          %s227 = scalar_lea.vmem [#allocation4], %s226
        $region80: #{tpu_custom_call.1} parent=75 // pred_fallthru
          _
      $region76: #{tpu_custom_call.1} parent=5 // pred_fallthru
        _
    $region6: #{tpu_custom_call.1} parent=1 // loop_footer
      %s18 = sadd.s32 1, %s14
    $region7: #{tpu_custom_call.1} parent=1 // loop_footer_branch
      %13 = sbr.rel target = $region3
    $region8: #{tpu_custom_call.1} parent=1 // loop_exit
      _

</llo_original>
